<compile_context>
chip_gen: v7x
topology: tpu7x:2x2x1
jax: 0.10.0
libtpu: 0.0.40
codegen_flags: <defaults>
</compile_context>

<pallas_src>
import math
import functools

import jax
import jax.numpy as jnp
from jax import lax
from jax.experimental import pallas as pl
from jax.experimental.pallas import tpu as pltpu


# ---------------------------------------------------------------------------------
# Stage 1: cumsum over H / W as triangular matmuls (MXU) + normalization
# ---------------------------------------------------------------------------------
def _embed_kernel(lt_ref, ut_ref, mask_ref, e_ref, *, normalize, scale, eps, offset):
    """(H,H) bf16 lower-tri, (W,W) bf16 upper-tri, (1,H,W) i32 mask
       -> (1,2,H,W) f32 (plane 0 = y_embed, plane 1 = x_embed)."""
    _, H, W = mask_ref.shape
    # torch: mask.to(int); not_mask = 1 - mask.  int32 keeps arbitrary ByteTensor
    # values exact; magnitudes <= 256 stay exact through the bf16 cast.
    nm = (1 - mask_ref[0]).astype(jnp.bfloat16)                           # (H, W)

    # y_embed[i, :] = sum_{k<=i} not_mask[k, :]  ->  L @ nm   (MXU, exact)
    y_embed = jnp.dot(lt_ref[...], nm, preferred_element_type=jnp.float32)
    # x_embed[:, j] = sum_{k<=j} not_mask[:, k]  ->  nm @ U   (MXU, exact)
    x_embed = jnp.dot(nm, ut_ref[...], preferred_element_type=jnp.float32)

    if normalize:
        # Reciprocal only on the (1,W)/(H,1) denominators, then broadcast-multiply.
        inv_y = pl.reciprocal(y_embed[H - 1:H, :] + eps, approx=False) * scale  # (1, W)
        inv_x = pl.reciprocal(x_embed[:, W - 1:W] + eps, approx=False) * scale  # (H, 1)
        y_embed = (y_embed + offset) * inv_y
        x_embed = (x_embed + offset) * inv_x

    e_ref[0, 0] = y_embed
    e_ref[0, 1] = x_embed


# ---------------------------------------------------------------------------------
# Stage 2: lane-dense channel expansion  [B, 2, HW] -> [B, C, HW]
# ---------------------------------------------------------------------------------
def _expand_kernel(e_ref, o_ref, *, num_feature, temperature, mode):
    """e block (1,2,HW) f32 -> o block (1,TC,HW) out_dtype.

    mode (static):
      "uniform": TC divides num_feature -> the tile is all-y or all-x; one
                 scalar-predicate row pick, no per-element select.
      "full":    TC == 2*num_feature   -> y/x halves computed separately and
                 stored into static sublane slices of the output block.
      "general": fallback for odd tilings -> per-element y/x select.
    Math is f32; only the final store casts to o_ref.dtype (e.g. bf16).
    """
    TC = o_ref.shape[1]
    F = num_feature
    neg2logT_over_F = -2.0 * math.log(temperature) / F
    half_pi = 0.5 * math.pi
    e = e_ref[0]                                                          # (2, HW)

    def sincos(emb, cfeat):
        # dim_t[c] = T ** (2*(c//2)/F); fold the divide into a multiply.
        inv_dim_t = jnp.exp((cfeat >> 1).astype(jnp.float32) * neg2logT_over_F)
        # even channel -> sin, odd channel -> cos == sin(x + pi/2): one EUP op/elem.
        # TODO(synk): on v7x with bf16 output, a bf16-EUP sin could ~2x this if the
        # EUP ever becomes the binding unit (accuracy-gated; f32 kept here).
        phase = (cfeat & 1).astype(jnp.float32) * half_pi
        return jnp.sin(emb * inv_dim_t + phase)

    if mode == "full":
        cf = lax.broadcasted_iota(jnp.int32, (F, 1), 0)                   # channel in feature
        o_ref[0, :F, :] = sincos(e[0:1, :], cf).astype(o_ref.dtype)       # pos_y
        o_ref[0, F:, :] = sincos(e[1:2, :], cf).astype(o_ref.dtype)       # pos_x
    elif mode == "uniform":
        c0 = pl.program_id(1) * TC                                        # global channel base
        cf = lax.broadcasted_iota(jnp.int32, (TC, 1), 0) + c0 % F
        emb = jnp.where(c0 < F, e[0:1, :], e[1:2, :])                     # scalar-pred select
        o_ref[0] = sincos(emb, cf).astype(o_ref.dtype)
    else:  # "general"
        c0 = pl.program_id(1) * TC
        gc = lax.broadcasted_iota(jnp.int32, (TC, 1), 0) + c0
        is_y = gc < F
        cf = jnp.where(is_y, gc, gc - F)
        emb = jnp.where(is_y, e[0:1, :], e[1:2, :])
        o_ref[0] = sincos(emb, cf).astype(o_ref.dtype)


def _pick_channel_tile(C, HW, num_feature, out_dtype, batch, target_bytes=4 << 20):
    """Pick (TC, mode) for the [B, C, HW] stage-2 output.

    Preferences, in order: block bytes <= target (double-buffered; keeps v5e's
    16 MiB default scoped VMEM happy), at least 2 tiles when batch == 1 (both
    v7x TensorCores busy), then the largest tile (~0.35us saved per grid step),
    then tiles that avoid the per-element y/x select.
    """
    itemsize = jnp.dtype(out_dtype).itemsize
    sub_mult = 8 if itemsize >= 4 else 16       # sub-32-bit dtypes pack along sublanes
    bytes_of = lambda tc: tc * HW * itemsize
    want_tiles = 2 if batch == 1 else 1

    # All-y / all-x tiles: divide num_feature and sublane-aligned.
    uniform = [d for d in range(sub_mult, num_feature + 1, sub_mult)
               if num_feature % d == 0]
    # Sublane-aligned tiles that divide C but mix y/x (hardening fallback only).
    mixed = [d for d in range(sub_mult, C, sub_mult)
             if C % d == 0 and d not in uniform]
    # Full-C tile: static half-stores are clean unless a sub-32-bit dtype with odd F.
    full_mode = "full" if (itemsize >= 4 or num_feature % 2 == 0) else "general"

    cands = ([(d, "uniform") for d in uniform]
             + [(C, full_mode)]
             + [(d, "general") for d in mixed])

    def score(item):
        tc, mode = item
        nbytes = bytes_of(tc)
        fits = nbytes <= target_bytes
        return (fits,
                (C // tc) >= want_tiles,
                nbytes if fits else -nbytes,   # largest that fits, else smallest
                {"uniform": 2, "full": 1, "general": 0}[mode])

    return max(cands, key=score)


def sine_positional_encoding_2d(mask, num_feature, temperature=10000,
                                normalize=True, scale=2 * math.pi,
                                eps=1e-6, offset=0.0, out_dtype=jnp.float32):
    """mask: [B, H, W] (nonzero = ignored). Returns [B, 2*num_feature, H, W] in out_dtype."""
    B, H, W = mask.shape
    C = 2 * num_feature
    HW = H * W

    # torch semantics: mask.to(int).  int32 avoids any overflow for ByteTensor masks.
    mask_i32 = mask.astype(jnp.int32)

    # Triangular cumsum operators built once in the wrapper; constant index_maps mean
    # Pallas DMAs them a single time and never rebuilds them per grid step.
    rh = jnp.arange(H, dtype=jnp.int32)
    lower_tri = (rh[:, None] >= rh[None, :]).astype(jnp.bfloat16)          # L[i,k] = (k <= i)
    rw = jnp.arange(W, dtype=jnp.int32)
    upper_tri = (rw[:, None] <= rw[None, :]).astype(jnp.bfloat16)          # U[k,j] = (k <= j)

    # Stage 1: cumsum + normalize -> [B, 2, H, W] f32 (tiny vs. the final output).
    embed = pl.pallas_call(
        functools.partial(_embed_kernel, normalize=normalize, scale=float(scale),
                          eps=float(eps), offset=float(offset)),
        out_shape=jax.ShapeDtypeStruct((B, 2, H, W), jnp.float32),
        grid=(B,),
        in_specs=[pl.BlockSpec((H, H), lambda b: (0, 0)),
                  pl.BlockSpec((W, W), lambda b: (0, 0)),
                  pl.BlockSpec((1, H, W), lambda b: (b, 0, 0))],
        out_specs=pl.BlockSpec((1, 2, H, W), lambda b: (b, 0, 0, 0)),
        compiler_params=pltpu.CompilerParams(dimension_semantics=("parallel",)),
    )(lower_tri, upper_tri, mask_i32)

    # Free, contiguous reshape to the lane-dense layout.
    embed_flat = embed.reshape(B, 2, HW)

    # Stage 2: channel expansion, lane-dense output [B, C, H*W] in out_dtype.
    TC, mode = _pick_channel_tile(C, HW, num_feature, out_dtype, B)
    n_ct = C // TC

    blk_bytes = TC * HW * jnp.dtype(out_dtype).itemsize
    vmem_limit = None
    if blk_bytes > (4 << 20):   # only the best-effort fallback ever exceeds the target
        vmem_limit = min(int(2.5 * blk_bytes) + (4 << 20), 100 << 20)

    pos_flat = pl.pallas_call(
        functools.partial(_expand_kernel, num_feature=num_feature,
                          temperature=float(temperature), mode=mode),
        out_shape=jax.ShapeDtypeStruct((B, C, HW), out_dtype),
        grid=(B, n_ct),
        in_specs=[pl.BlockSpec((1, 2, HW), lambda b, c: (b, 0, 0))],
        out_specs=pl.BlockSpec((1, TC, HW), lambda b, c: (b, c, 0)),
        compiler_params=pltpu.CompilerParams(
            dimension_semantics=("parallel", "parallel"),
            vmem_limit_bytes=vmem_limit),
    )(embed_flat)

    # Free, contiguous reshape back to NCHW.
    return pos_flat.reshape(B, C, H, W)


def _reference(mask, num_feature, temperature=10000, normalize=True,
               scale=2 * math.pi, eps=1e-6, offset=0.0):
    """Pure-JAX transcription of the PyTorch forward, for verification."""
    mask = mask.astype(jnp.int32)
    not_mask = 1 - mask
    y_embed = jnp.cumsum(not_mask, axis=1, dtype=jnp.float32)
    x_embed = jnp.cumsum(not_mask, axis=2, dtype=jnp.float32)
    if normalize:
        y_embed = (y_embed + offset) / (y_embed[:, -1:, :] + eps) * scale
        x_embed = (x_embed + offset) / (x_embed[:, :, -1:] + eps) * scale
    dim_t = jnp.arange(num_feature, dtype=jnp.float32)
    dim_t = temperature ** (2 * (dim_t // 2) / num_feature)
    pos_x = x_embed[:, :, :, None] / dim_t
    pos_y = y_embed[:, :, :, None] / dim_t
    B, H, W = mask.shape
    pos_x = jnp.stack((jnp.sin(pos_x[:, :, :, 0::2]),
                       jnp.cos(pos_x[:, :, :, 1::2])), axis=4).reshape(B, H, W, -1)
    pos_y = jnp.stack((jnp.sin(pos_y[:, :, :, 0::2]),
                       jnp.cos(pos_y[:, :, :, 1::2])), axis=4).reshape(B, H, W, -1)
    pos = jnp.concatenate((pos_y, pos_x), axis=3).transpose(0, 3, 1, 2)
    return pos


if __name__ == "__main__":
    key = jax.random.PRNGKey(0)
    key_a, key_b = jax.random.split(key)

    # --- config 1: f32 output, full-C channel tile ("full" path, mixed y/x tile) ---
    B, H, W, F = 2, 16, 16, 4
    mask = (jax.random.uniform(key_a, (B, H, W)) < 0.3).astype(jnp.int32)
    pos = jax.block_until_ready(sine_positional_encoding_2d(mask, F))
    ref = _reference(mask, F)
    assert pos.shape == (B, 2 * F, H, W)
    assert jnp.allclose(pos, ref, atol=1e-4, rtol=1e-4), \
        float(jnp.max(jnp.abs(pos - ref)))

    # --- config 2: bf16 output (halves the HBM write traffic of the store-bound stage) ---
    pos_bf16 = jax.block_until_ready(
        sine_positional_encoding_2d(mask, F, out_dtype=jnp.bfloat16))
    assert pos_bf16.dtype == jnp.bfloat16
    assert jnp.allclose(pos_bf16.astype(jnp.float32), ref, atol=2e-2, rtol=2e-2)

    # --- config 3: B == 1 forces >= 2 channel tiles ("uniform" all-y/all-x path) ---
    B2, F2 = 1, 8
    mask2 = (jax.random.uniform(key_b, (B2, H, W)) < 0.3).astype(jnp.int32)
    pos2 = jax.block_until_ready(sine_positional_encoding_2d(mask2, F2))
    ref2 = _reference(mask2, F2)
    assert jnp.allclose(pos2, ref2, atol=1e-4, rtol=1e-4), \
        float(jnp.max(jnp.abs(pos2 - ref2)))

    print("KERNEL_OK")
</pallas_src>

<mosaic_0001>
module attributes {stable_mosaic.version = 11 : i64} {
  func.func @_embed_kernel(%arg0: i32, %arg1: memref<16x16xbf16, #tpu.memory_space<vmem>>, %arg2: memref<16x16xbf16, #tpu.memory_space<vmem>>, %arg3: memref<1x16x16xi32, #tpu.memory_space<vmem>>, %arg4: memref<1x2x16x16xf32, #tpu.memory_space<vmem>>) attributes {dimension_semantics = [#tpu.dimension_semantics<parallel>], iteration_bounds = array<i64: 2>, scalar_prefetch = 0 : i64, scratch_operands = 0 : i64, tpu.core_type = #tpu.core_type<tc>, window_params = [{pipeline_mode = #tpu.pipeline_mode<synchronous>, transform_indices = @transform_0, window_bounds = array<i64: 16, 16>}, {pipeline_mode = #tpu.pipeline_mode<synchronous>, transform_indices = @transform_1, window_bounds = array<i64: 16, 16>}, {transform_indices = @transform_2, window_bounds = array<i64: 1, 16, 16>}, {transform_indices = @transform_3, window_bounds = array<i64: 1, 2, 16, 16>}]} {
    %c0 = arith.constant 0 : index
    %c0_0 = arith.constant 0 : index
    %c0_1 = arith.constant 0 : index
    %0 = vector.load %arg3[%c0, %c0_0, %c0_1] : memref<1x16x16xi32, #tpu.memory_space<vmem>>, vector<1x16x16xi32>
    %1 = vector.shape_cast %0 : vector<1x16x16xi32> to vector<16x16xi32>
    %c1_i32 = arith.constant 1 : i32
    %2 = vector.broadcast %c1_i32 : i32 to vector<16x16xi32>
    %3 = arith.subi %2, %1 : vector<16x16xi32>
    %4 = arith.sitofp %3 : vector<16x16xi32> to vector<16x16xbf16>
    %c0_2 = arith.constant 0 : index
    %c0_3 = arith.constant 0 : index
    %5 = vector.load %arg1[%c0_2, %c0_3] : memref<16x16xbf16, #tpu.memory_space<vmem>>, vector<16x16xbf16>
    %cst = arith.constant dense<0.000000e+00> : vector<16x16xf32>
    %6 = tpu.matmul %5, %4, %cst {dimension_numbers = #tpu.dot_dimension_numbers<[1], [0], [0], [1], [0, 0, 1, 1], [], []>} : vector<16x16xbf16>, vector<16x16xbf16>, vector<16x16xf32> -> vector<16x16xf32>
    %c0_4 = arith.constant 0 : index
    %c0_5 = arith.constant 0 : index
    %7 = vector.load %arg2[%c0_4, %c0_5] : memref<16x16xbf16, #tpu.memory_space<vmem>>, vector<16x16xbf16>
    %cst_6 = arith.constant dense<0.000000e+00> : vector<16x16xf32>
    %8 = tpu.matmul %4, %7, %cst_6 {dimension_numbers = #tpu.dot_dimension_numbers<[1], [0], [0], [1], [0, 0, 1, 1], [], []>} : vector<16x16xbf16>, vector<16x16xbf16>, vector<16x16xf32> -> vector<16x16xf32>
    %9 = vector.extract_strided_slice %6 {offsets = [15, 0], sizes = [1, 16], strides = [1, 1]} : vector<16x16xf32> to vector<1x16xf32>
    %cst_7 = arith.constant 9.99999997E-7 : f32
    %10 = vector.broadcast %cst_7 : f32 to vector<1x16xf32>
    %11 = arith.addf %9, %10 : vector<1x16xf32>
    %12 = tpu.reciprocal %11 : vector<1x16xf32> -> vector<1x16xf32>
    %cst_8 = arith.constant 6.28318548 : f32
    %13 = vector.broadcast %cst_8 : f32 to vector<1x16xf32>
    %14 = arith.mulf %12, %13 : vector<1x16xf32>
    %15 = vector.extract_strided_slice %8 {offsets = [0, 15], sizes = [16, 1], strides = [1, 1]} : vector<16x16xf32> to vector<16x1xf32>
    %cst_9 = arith.constant 9.99999997E-7 : f32
    %16 = vector.broadcast %cst_9 : f32 to vector<16x1xf32>
    %17 = arith.addf %15, %16 : vector<16x1xf32>
    %18 = tpu.reciprocal %17 : vector<16x1xf32> -> vector<16x1xf32>
    %cst_10 = arith.constant 6.28318548 : f32
    %19 = vector.broadcast %cst_10 : f32 to vector<16x1xf32>
    %20 = arith.mulf %18, %19 : vector<16x1xf32>
    %cst_11 = arith.constant 0.000000e+00 : f32
    %21 = vector.broadcast %cst_11 : f32 to vector<16x16xf32>
    %22 = arith.addf %6, %21 : vector<16x16xf32>
    %23 = vector.broadcast %14 : vector<1x16xf32> to vector<16x16xf32>
    %24 = arith.mulf %22, %23 : vector<16x16xf32>
    %cst_12 = arith.constant 0.000000e+00 : f32
    %25 = vector.broadcast %cst_12 : f32 to vector<16x16xf32>
    %26 = arith.addf %8, %25 : vector<16x16xf32>
    %27 = vector.broadcast %20 : vector<16x1xf32> to vector<16x16xf32>
    %28 = arith.mulf %26, %27 : vector<16x16xf32>
    %c0_13 = arith.constant 0 : index
    %c0_14 = arith.constant 0 : index
    %c0_15 = arith.constant 0 : index
    %c0_16 = arith.constant 0 : index
    %29 = vector.load %arg4[%c0_13, %c0_14, %c0_15, %c0_16] : memref<1x2x16x16xf32, #tpu.memory_space<vmem>>, vector<1x1x16x16xf32>
    %30 = vector.shape_cast %29 : vector<1x1x16x16xf32> to vector<16x16xf32>
    %31 = vector.shape_cast %24 : vector<16x16xf32> to vector<1x1x16x16xf32>
    tpu.vector_store %arg4[%c0_13, %c0_14, %c0_15, %c0_16], %31 {strides = array<i32>} : memref<1x2x16x16xf32, #tpu.memory_space<vmem>>, vector<1x1x16x16xf32>,
    %c0_17 = arith.constant 0 : index
    %c1 = arith.constant 1 : index
    %c0_18 = arith.constant 0 : index
    %c0_19 = arith.constant 0 : index
    %32 = vector.load %arg4[%c0_17, %c1, %c0_18, %c0_19] : memref<1x2x16x16xf32, #tpu.memory_space<vmem>>, vector<1x1x16x16xf32>
    %33 = vector.shape_cast %32 : vector<1x1x16x16xf32> to vector<16x16xf32>
    %34 = vector.shape_cast %28 : vector<16x16xf32> to vector<1x1x16x16xf32>
    tpu.vector_store %arg4[%c0_17, %c1, %c0_18, %c0_19], %34 {strides = array<i32>} : memref<1x2x16x16xf32, #tpu.memory_space<vmem>>, vector<1x1x16x16xf32>,
    return
  }
  func.func @transform_0(%arg0: i32) -> (i32, i32) {
    %c0_i32 = arith.constant 0 : i32
    %c0_i32_0 = arith.constant 0 : i32
    %c0_i32_1 = arith.constant 0 : i32
    return %c0_i32, %c0_i32_0 : i32, i32
  }
  func.func @transform_1(%arg0: i32) -> (i32, i32) {
    %c0_i32 = arith.constant 0 : i32
    %c0_i32_0 = arith.constant 0 : i32
    %c0_i32_1 = arith.constant 0 : i32
    return %c0_i32, %c0_i32_0 : i32, i32
  }
  func.func @transform_2(%arg0: i32) -> (i32, i32, i32) {
    %c0_i32 = arith.constant 0 : i32
    %c0_i32_0 = arith.constant 0 : i32
    %c0_i32_1 = arith.constant 0 : i32
    return %arg0, %c0_i32, %c0_i32_0 : i32, i32, i32
  }
  func.func @transform_3(%arg0: i32) -> (i32, i32, i32, i32) {
    %c0_i32 = arith.constant 0 : i32
    %c0_i32_0 = arith.constant 0 : i32
    %c0_i32_1 = arith.constant 0 : i32
    %c0_i32_2 = arith.constant 0 : i32
    return %arg0, %c0_i32, %c0_i32_0, %c0_i32_1 : i32, i32, i32, i32
  }
}

</mosaic_0001>

<llo_original>
// kernel: tpu_custom_call.1
$region0: #{tpu_custom_call.1}
  #allocation0 [shape = 'u32[]', space=smem, size = 0x4, offset = 0x4, fixed_abs, tag = 'smem constant byte address 0x4 - core index']
  #allocation1 [shape = 'u32[144,128]{1,0:T(1,128)}', space=vmem, size = 0x12000, scoped, tag = 'internal scratch']
  %s0 = inlined_call_operand.hbm [shape: bf16[16,16], index: 0, kind: input, shape index: {}]
  %s1 = inlined_call_operand.hbm [shape: bf16[16,16], index: 1, kind: input, shape index: {}]
  %s2 = inlined_call_operand.hbm [shape: s32[2,16,16], index: 2, kind: input, shape index: {}]
  %s3 = inlined_call_operand.hbm [shape: f32[2,2,16,16], index: 3, kind: output, shape index: {}]
  %s4 = sld [smem:[#allocation0]]
  $region57: #{tpu_custom_call.1} parent=0
    _
  %s6 = ssub.s32 1, %s4
  %s7 = scalar_select 0, %s6, %s4
  $region1: #{tpu_custom_call.1} parent=0
    #allocation2 [shape = 'u8[4096]{0}', space=vmem, size = 0x1000, scoped, tag = 'input window, operand 0, single buffered']
    #allocation3 [shape = 's32[2]{0}', space=sflag, size = 0x8, scoped, tag = 'scoped memory for tpu_custom_call.1']
    #allocation4 [shape = 's32[2]{0}', space=sflag, size = 0x8, scoped, tag = 'scoped memory for tpu_custom_call.1']
    #allocation5 [shape = 'u8[4096]{0}', space=vmem, size = 0x1000, scoped, tag = 'input window, operand 1, single buffered']
    #allocation6 [shape = 's32[1]{0}', space=sflag, size = 0x4, scoped, tag = 'scoped memory for tpu_custom_call.1']
    #allocation7 [shape = 'u8[16384]{0}', space=vmem, size = 0x4000, scoped, tag = 'input window, operand 2']
    #allocation8 [shape = 'u8[32768]{0}', space=vmem, size = 0x8000, scoped, tag = 'output window, operand 0']
    %8 = vsyncpa [#allocation3], 0
    %9 = vsyncpa [#allocation6], 0
    %10 = vsyncpa [#allocation4], 0
    %s11 = scalar_lea.sflag [#allocation4], 1
    %12 = vsyncpa %s11, 0
    loop: start=0, step=1, limit=4
    $region2: #{tpu_custom_call.1} parent=1 // loop_pre_header
      _
    $region3: #{tpu_custom_call.1} parent=1 // loop_header
      %s14 = sphi 0, %s18
      %p15 = scmp.ge.s32.totalorder %s14, 4
      %s22 = sphi 0, %s22
      %s24 = sphi 0, %s22
      %s25 = sphi 0, %s24
      %s39 = sphi 0, %s25
      %s43 = sphi 0, %s43
      %s45 = sphi 0, %s43
      %s46 = sphi 0, %s45
      %s60 = sphi 0, %s46
      %s66 = sphi 0, %s68
      %s69 = sphi 0, %s66
      %s70 = sphi 0, %s69
      %s86 = sphi 0, %s70
      %s92 = sphi 0, %s94
      %s95 = sphi 0, %s92
      %s96 = sphi 0, %s95
      %s112 = sphi 0, %s96
    $region4: #{tpu_custom_call.1} parent=1 // loop_header_branch
      %17 = sbr.rel (%p15) target = $region8
    $region5: #{tpu_custom_call.1} parent=1 // loop_body
      %s19 = ssub.s32 %s14, 1
      %s20 = ssub.s32 %s14, 2
      %s21 = sadd.s32 %s14, 1
      %s23 = sadd.s32 %s22, 1
      %p26 = scmp.eq.s32.totalorder %s14, 1
      %p27 = scmp.ne.s32.totalorder %s22, %s24
      %p28 = scmp.eq.s32.totalorder %s14, 0
      %p29 = por %p27, %p28
      %p30 = scmp.ne.s32.totalorder %s22, %s24
      %p31 = scmp.eq.s32.totalorder %s19, 1
      %p32 = por %p30, %p31
      %p33 = scmp.ne.s32.totalorder %s24, %s25
      %p34 = scmp.eq.s32.totalorder %s19, 0
      %p35 = por %p33, %p34
      %p36 = scmp.ne.s32.totalorder %s24, %s25
      %p37 = scmp.eq.s32.totalorder %s20, 1
      %p38 = por %p36, %p37
      %p40 = scmp.ne.s32.totalorder %s25, %s39
      %p41 = scmp.eq.s32.totalorder %s20, 0
      %p42 = por %p40, %p41
      %s44 = sadd.s32 %s43, 1
      %p47 = scmp.eq.s32.totalorder %s14, 1
      %p48 = scmp.ne.s32.totalorder %s43, %s45
      %p49 = scmp.eq.s32.totalorder %s14, 0
      %p50 = por %p48, %p49
      %p51 = scmp.ne.s32.totalorder %s43, %s45
      %p52 = scmp.eq.s32.totalorder %s19, 1
      %p53 = por %p51, %p52
      %p54 = scmp.ne.s32.totalorder %s45, %s46
      %p55 = scmp.eq.s32.totalorder %s19, 0
      %p56 = por %p54, %p55
      %p57 = scmp.ne.s32.totalorder %s45, %s46
      %p58 = scmp.eq.s32.totalorder %s20, 1
      %p59 = por %p57, %p58
      %p61 = scmp.ne.s32.totalorder %s46, %s60
      %p62 = scmp.eq.s32.totalorder %s20, 0
      %p63 = por %p61, %p62
      %s64 = ssub.s32 %s14, %s21
      %p65 = scmp.eq.s32.totalorder %s64, 0
      %s67 = sadd.s32 %s66, 1
      %s68 = scalar_select %p65, %s66, %s67
      %p71 = pneg %p65
      %p72 = scmp.eq.s32.totalorder %s14, 1
      %p73 = por %p71, %p72
      %p74 = scmp.ne.s32.totalorder %s66, %s69
      %p75 = scmp.eq.s32.totalorder %s14, 0
      %p76 = por %p74, %p75
      %p77 = scmp.ne.s32.totalorder %s66, %s69
      %p78 = scmp.eq.s32.totalorder %s19, 1
      %p79 = por %p77, %p78
      %p80 = scmp.ne.s32.totalorder %s69, %s70
      %p81 = scmp.eq.s32.totalorder %s19, 0
      %p82 = por %p80, %p81
      %p83 = scmp.ne.s32.totalorder %s69, %s70
      %p84 = scmp.eq.s32.totalorder %s20, 1
      %p85 = por %p83, %p84
      %p87 = scmp.ne.s32.totalorder %s70, %s86
      %p88 = scmp.eq.s32.totalorder %s20, 0
      %p89 = por %p87, %p88
      %s90 = ssub.s32 %s14, %s21
      %p91 = scmp.eq.s32.totalorder %s90, 0
      %s93 = sadd.s32 %s92, 1
      %s94 = scalar_select %p91, %s92, %s93
      %p97 = pneg %p91
      %p98 = scmp.eq.s32.totalorder %s14, 1
      %p99 = por %p97, %p98
      %p100 = scmp.ne.s32.totalorder %s92, %s95
      %p101 = scmp.eq.s32.totalorder %s14, 0
      %p102 = por %p100, %p101
      %p103 = scmp.ne.s32.totalorder %s92, %s95
      %p104 = scmp.eq.s32.totalorder %s19, 1
      %p105 = por %p103, %p104
      %p106 = scmp.ne.s32.totalorder %s95, %s96
      %p107 = scmp.eq.s32.totalorder %s19, 0
      %p108 = por %p106, %p107
      %p109 = scmp.ne.s32.totalorder %s95, %s96
      %p110 = scmp.eq.s32.totalorder %s20, 1
      %p111 = por %p109, %p110
      %p113 = scmp.ne.s32.totalorder %s96, %s112
      %p114 = scmp.eq.s32.totalorder %s20, 0
      %p115 = por %p113, %p114
      %p116 = scmp.le.s32.totalorder 1, %s14
      %p117 = scmp.lt.s32.totalorder %s14, 3
      %p118 = pnand %p116, %p117
      %p119 = pneg %p118
      // Predicated region
      $region9: #{tpu_custom_call.1} parent=5 // pred_check
        _
      $region10: #{tpu_custom_call.1} parent=5 // pred_check_branch
        %121 = sbr.rel (%p118) target = $region12
      $region11: #{tpu_custom_call.1} parent=5 // pred_region
        %s122 = ssub.s32 %s14, 1
        // Predicated region
        $region13: #{tpu_custom_call.1} parent=11 // pred_check
          %p123 = pneg %p35
        $region14: #{tpu_custom_call.1} parent=11 // pred_check_branch
          %125 = sbr.rel (%p123) target = $region16
        $region15: #{tpu_custom_call.1} parent=11 // pred_region
          %s127 = ssub.s32 128, 128
          %128 = vsyncadd [#allocation3], %s127
          %s129 = sshll.u32 [#allocation2], 4
          %s130 = int_to_ptr.vmem [resolvable:$true] %s129
          %135 = dma.hbm_to_vmem [thread:$0]  %s0, 128, %s130, [#allocation3], 64, 64, 4
        $region16: #{tpu_custom_call.1} parent=11 // pred_fallthru
          _
        // Predicated region
        $region17: #{tpu_custom_call.1} parent=11 // pred_check
          %p136 = pneg %p56
        $region18: #{tpu_custom_call.1} parent=11 // pred_check_branch
          %138 = sbr.rel (%p136) target = $region20
        $region19: #{tpu_custom_call.1} parent=11 // pred_region
          %s140 = ssub.s32 128, 128
          %141 = vsyncadd [#allocation6], %s140
          %s142 = sshll.u32 [#allocation5], 4
          %s143 = int_to_ptr.vmem [resolvable:$true] %s142
          %148 = dma.hbm_to_vmem [thread:$0]  %s1, 128, %s143, [#allocation6], 64, 64, 4
        $region20: #{tpu_custom_call.1} parent=11 // pred_fallthru
          _
      $region12: #{tpu_custom_call.1} parent=5 // pred_fallthru
        _
      %p149 = scmp.lt.s32.totalorder %s14, 2
      // Predicated region
      $region21: #{tpu_custom_call.1} parent=5 // pred_check
        %p150 = pneg %p149
      $region22: #{tpu_custom_call.1} parent=5 // pred_check_branch
        %152 = sbr.rel (%p150) target = $region24
      $region23: #{tpu_custom_call.1} parent=5 // pred_region
        // Predicated region
        $region25: #{tpu_custom_call.1} parent=23 // pred_check
          %p153 = pneg %p76
        $region26: #{tpu_custom_call.1} parent=23 // pred_check_branch
          %155 = sbr.rel (%p153) target = $region28
        $region27: #{tpu_custom_call.1} parent=23 // pred_region
          %s156 = sand.u32 %s14, 1
          %s157 = scalar_lea.sflag [#allocation3], %s156
          %s158 = sand.u32 %s66, 1
          %s159 = smul.addr %s158, 16
          %s160 = scalar_lea.vmem [#allocation7], %s159
          %s162 = ssub.s32 256, 256
          %163 = vsyncadd %s157, %s162
          %s164 = smul.addr %s14, 2
          %s165 = smul.addr %s164, 128
          %s166 = scalar_lea.hbm %s2, %s165
          %s167 = sshll.u32 %s160, 4
          %s168 = int_to_ptr.vmem [resolvable:$true] %s167
          %173 = dma.hbm_to_vmem [thread:$0]  %s166, 256, %s168, %s157, 128, 128, 8
        $region28: #{tpu_custom_call.1} parent=23 // pred_fallthru
          _
      $region24: #{tpu_custom_call.1} parent=5 // pred_fallthru
        _
      %p174 = scmp.le.s32.totalorder 1, %s14
      %p175 = scmp.lt.s32.totalorder %s14, 3
      %p176 = pnand %p174, %p175
      %p177 = pneg %p176
      // Predicated region
      $region29: #{tpu_custom_call.1} parent=5 // pred_check
        _
      $region30: #{tpu_custom_call.1} parent=5 // pred_check_branch
        %179 = sbr.rel (%p176) target = $region32
      $region31: #{tpu_custom_call.1} parent=5 // pred_region
        %s180 = ssub.s32 %s14, 1
        // Predicated region
        $region33: #{tpu_custom_call.1} parent=31 // pred_check
          %p181 = pneg %p35
        $region34: #{tpu_custom_call.1} parent=31 // pred_check_branch
          %183 = sbr.rel (%p181) target = $region36
        $region35: #{tpu_custom_call.1} parent=31 // pred_region
          %184 = dma.done [#allocation3], 128
        $region36: #{tpu_custom_call.1} parent=31 // pred_fallthru
          _
        // Predicated region
        $region37: #{tpu_custom_call.1} parent=31 // pred_check
          %p185 = pneg %p56
        $region38: #{tpu_custom_call.1} parent=31 // pred_check_branch
          %187 = sbr.rel (%p185) target = $region40
        $region39: #{tpu_custom_call.1} parent=31 // pred_region
          %188 = dma.done [#allocation6], 128
        $region40: #{tpu_custom_call.1} parent=31 // pred_fallthru
          _
        %s189 = sand.u32 %s19, 1
        %s190 = scalar_lea.sflag [#allocation3], %s189
        %s191 = sand.u32 %s69, 1
        %s192 = smul.addr %s191, 16
        %s193 = scalar_lea.vmem [#allocation7], %s192
        // Predicated region
        $region41: #{tpu_custom_call.1} parent=31 // pred_check
          %p194 = pneg %p82
        $region42: #{tpu_custom_call.1} parent=31 // pred_check_branch
          %196 = sbr.rel (%p194) target = $region44
        $region43: #{tpu_custom_call.1} parent=31 // pred_region
          %197 = dma.done %s190, 256
        $region44: #{tpu_custom_call.1} parent=31 // pred_fallthru
          _
        %p198 = pneg %p35
        %p199 = pneg %p32
        %p200 = pneg %p56
        %p201 = pneg %p53
        %s202 = sand.u32 %s19, 1
        %s203 = scalar_lea.sflag [#allocation3], %s202
        %s204 = sand.u32 %s69, 1
        %s205 = smul.addr %s204, 16
        %s206 = scalar_lea.vmem [#allocation7], %s205
        %p207 = pneg %p82
        %p208 = pneg %p79
        %p209 = pneg %p108
        %p210 = pneg %p105
        %s211 = sand.u32 %s95, 1
        %s212 = scalar_lea.sflag [#allocation4], %s211
        %s213 = sand.u32 %s95, 1
        %s214 = smul.addr %s213, 32
        %s215 = scalar_lea.vmem [#allocation8], %s214
        %v217 = vld [vmem:[%s193] sm:$0xff]
        %v218 = vld [vmem:[%s193 + $0x8] sm:$0xff]
        %v219 = vsub.s32 1, %v217
        %v220 = vsub.s32 1, %v218
        %v221 = vcvt.s32.f32 %v219
        %v222 = vcvt.s32.f32 %v220
        %v223 = vpack.c.bf16 %v222, %v221
        %v224 = vld [vmem:[#allocation2] sm:$0xf]
        %v225 = vld [vmem:[#allocation2 + $0x4] sm:$0xf]
        %v228 = vunpack.c.l.b16 %v224
        %v229 = vunpack.c.l.b16 %v225
        %v230 = vpack.c.b16 %v229, %v228
        %vm231 = vcmask 130048
        %v233 = vsel %vm231, %v230, 0
        %235 = vmatprep.subr.bf16.mxu0 0
        %236 = vmatpush1.bf16.msra.mxu0 %v223
        %237 = vmatprep.subr.bf16.mxu0 0
        %238 = vmatpush1.bf16.msra.mxu0 0
        %239 = vmatprep.subr.bf16.mxu0 0
        %240 = vmatpush1.bf16.msra.mxu0 0
        %241 = vmatprep.subr.bf16.mxu0 0
        %242 = vmatpush1.bf16.msra.mxu0 0
        %243 = vmatprep.subr.bf16.mxu0 0
        %244 = vmatpush1.bf16.msra.mxu0 0
        %245 = vmatprep.subr.bf16.mxu0 0
        %246 = vmatpush1.bf16.msra.mxu0 0
        %247 = vmatprep.subr.bf16.mxu0 0
        %248 = vmatpush1.bf16.msra.mxu0 0
        %249 = vmatprep.subr.bf16.mxu0 0
        %250 = vmatpush1.bf16.msra.mxu0 0
        %251 = vmatprep.subr.bf16.mxu0 0
        %252 = vmatpush1.bf16.msra.mxu0 0
        %253 = vmatprep.subr.bf16.mxu0 0
        %254 = vmatpush1.bf16.msra.mxu0 0
        %255 = vmatprep.subr.bf16.mxu0 0
        %256 = vmatpush1.bf16.msra.mxu0 0
        %257 = vmatprep.subr.bf16.mxu0 0
        %258 = vmatpush1.bf16.msra.mxu0 0
        %259 = vmatprep.subr.bf16.mxu0 0
        %260 = vmatpush1.bf16.msra.mxu0 0
        %261 = vmatprep.subr.bf16.mxu0 0
        %262 = vmatpush1.bf16.msra.mxu0 0
        %263 = vmatprep.subr.bf16.mxu0 0
        %264 = vmatpush1.bf16.msra.mxu0 0
        %265 = vmatprep.subr.bf16.mxu0 0
        %266 = vmatpush1.bf16.msra.mxu0 0
        %267 = vmatprep.mubr.bf16.mxu0 0
        %268 = vmatmul.mubr.bf16.gmra.mrb[0].mxu0 %v233
        %v269 = vpop.f32.mrb[0].mxu0
        %v270 = vadd.f32 0.0, %v269
        %v271 = vpop.f32.mrb[0].mxu0
        %v272 = vpop.f32.mrb[0].mxu0
        %v273 = vadd.f32 0.0, %v272
        %v274 = vpop.f32.mrb[0].mxu0
        %275 = vdwg.mxu0
        %v276 = vld [vmem:[#allocation5] sm:$0xf]
        %v277 = vld [vmem:[#allocation5 + $0x4] sm:$0xf]
        %v280 = vunpack.c.l.b16 %v276
        %v281 = vunpack.c.l.b16 %v277
        %v282 = vpack.c.b16 %v281, %v280
        %v285 = vsel %vm231, %v223, 0
        %287 = vmatprep.subr.bf16.mxu0 0
        %288 = vmatpush1.bf16.msra.mxu0 %v282
        %289 = vmatprep.subr.bf16.mxu0 0
        %290 = vmatpush1.bf16.msra.mxu0 0
        %291 = vmatprep.subr.bf16.mxu0 0
        %292 = vmatpush1.bf16.msra.mxu0 0
        %293 = vmatprep.subr.bf16.mxu0 0
        %294 = vmatpush1.bf16.msra.mxu0 0
        %295 = vmatprep.subr.bf16.mxu0 0
        %296 = vmatpush1.bf16.msra.mxu0 0
        %297 = vmatprep.subr.bf16.mxu0 0
        %298 = vmatpush1.bf16.msra.mxu0 0
        %299 = vmatprep.subr.bf16.mxu0 0
        %300 = vmatpush1.bf16.msra.mxu0 0
        %301 = vmatprep.subr.bf16.mxu0 0
        %302 = vmatpush1.bf16.msra.mxu0 0
        %303 = vmatprep.subr.bf16.mxu0 0
        %304 = vmatpush1.bf16.msra.mxu0 0
        %305 = vmatprep.subr.bf16.mxu0 0
        %306 = vmatpush1.bf16.msra.mxu0 0
        %307 = vmatprep.subr.bf16.mxu0 0
        %308 = vmatpush1.bf16.msra.mxu0 0
        %309 = vmatprep.subr.bf16.mxu0 0
        %310 = vmatpush1.bf16.msra.mxu0 0
        %311 = vmatprep.subr.bf16.mxu0 0
        %312 = vmatpush1.bf16.msra.mxu0 0
        %313 = vmatprep.subr.bf16.mxu0 0
        %314 = vmatpush1.bf16.msra.mxu0 0
        %315 = vmatprep.subr.bf16.mxu0 0
        %316 = vmatpush1.bf16.msra.mxu0 0
        %317 = vmatprep.subr.bf16.mxu0 0
        %318 = vmatpush1.bf16.msra.mxu0 0
        %319 = vmatprep.mubr.bf16.mxu0 0
        %320 = vmatmul.mubr.bf16.gmra.mrb[0].mxu0 %v285
        %v321 = vpop.f32.mrb[0].mxu0
        %v322 = vadd.f32 0.0, %v321
        %v323 = vpop.f32.mrb[0].mxu0
        %v324 = vpop.f32.mrb[0].mxu0
        %v325 = vadd.f32 0.0, %v324
        %v326 = vpop.f32.mrb[0].mxu0
        %327 = vdwg.mxu0
        %v328 = vadd.f32 %v273, 1e-06
        %v329 = vrcp.pop %v328
        %v330 = vmul.f32 %v329, 6.2831855
        %v331 = vadd.f32 %v322, 1e-06
        %v332 = vadd.f32 %v325, 1e-06
        %v333 = vrcp.pop %v331
        %v334 = vrcp.pop %v332
        %v335 = vmul.f32 %v333, 6.2831855
        %v336 = vmul.f32 %v334, 6.2831855
        %v337 = vadd.f32 %v270, 0.0
        %v338 = vadd.f32 %v273, 0.0
        %v339 = vlaneseq
        %v340 = vshrl.u32 %v339, 7
        %v341 = vsub.s32 7, %v340
        %v342 = vrot.slane %v330, %v341
        %v343 = vmul.f32 %v337, %v342
        %v344 = vmul.f32 %v338, %v342
        %v345 = vadd.f32 %v322, 0.0
        %v346 = vadd.f32 %v325, 0.0
        %348 = vset.pattern.permute.xlu0 15
        %349 = vperm.xlu0 %348, %v335
        %v350 = vpop.permute.xlu0 %349
        %353 = vset.pattern.permute.xlu0 15
        %354 = vperm.xlu0 %353, %v336
        %v355 = vpop.permute.xlu0 %354
        %v357 = vmul.f32 %v345, %v350
        %v358 = vmul.f32 %v346, %v355
        %359 = vst.msk [vmem:[%s215] sm:$0xff] %vm231, %v343
        %360 = vst.msk [vmem:[%s215 + $0x8] sm:$0xff] %vm231, %v344
        %s361 = scalar_lea.vmem %s215, 16 [#allocation8]
        %362 = vst.msk [vmem:[%s361] sm:$0xff] %vm231, %v357
        %363 = vst.msk [vmem:[%s361 + $0x8] sm:$0xff] %vm231, %v358
        %s364 = sand.u32 %s95, 1
        %s365 = scalar_lea.sflag [#allocation4], %s364
        %s366 = sand.u32 %s95, 1
        %s367 = smul.addr %s366, 32
        %s368 = scalar_lea.vmem [#allocation8], %s367
        // Predicated region
        $region45: #{tpu_custom_call.1} parent=31 // pred_check
          %p369 = pneg %p105
        $region46: #{tpu_custom_call.1} parent=31 // pred_check_branch
          %371 = sbr.rel (%p369) target = $region48
        $region47: #{tpu_custom_call.1} parent=31 // pred_region
          %s373 = ssub.s32 512, 512
          %374 = vsyncadd %s365, %s373
          %s375 = smul.addr %s19, 4
          %s376 = smul.addr %s375, 128
          %s377 = scalar_lea.hbm %s3, %s376
          %s378 = sshll.u32 %s368, 4
          %s379 = int_to_ptr.vmem [resolvable:$true] %s378
          %384 = dma.vmem_to_hbm [thread:$0]  %s379, 512, %s377, %s365, 128, 128, 8
        $region48: #{tpu_custom_call.1} parent=31 // pred_fallthru
          _
      $region32: #{tpu_custom_call.1} parent=5 // pred_fallthru
        _
      %p385 = scmp.le.s32.totalorder 2, %s14
      // Predicated region
      $region49: #{tpu_custom_call.1} parent=5 // pred_check
        %p386 = pneg %p385
      $region50: #{tpu_custom_call.1} parent=5 // pred_check_branch
        %388 = sbr.rel (%p386) target = $region52
      $region51: #{tpu_custom_call.1} parent=5 // pred_region
        %s389 = ssub.s32 %s14, 2
        // Predicated region
        $region53: #{tpu_custom_call.1} parent=51 // pred_check
          %p390 = pneg %p111
        $region54: #{tpu_custom_call.1} parent=51 // pred_check_branch
          %392 = sbr.rel (%p390) target = $region56
        $region55: #{tpu_custom_call.1} parent=51 // pred_region
          %s393 = sand.u32 %s96, 1
          %s394 = scalar_lea.sflag [#allocation4], %s393
          %s395 = sand.u32 %s96, 1
          %s396 = smul.addr %s395, 32
          %s397 = scalar_lea.vmem [#allocation8], %s396
          %398 = dma.done %s394, 512
        $region56: #{tpu_custom_call.1} parent=51 // pred_fallthru
          _
      $region52: #{tpu_custom_call.1} parent=5 // pred_fallthru
        _
    $region6: #{tpu_custom_call.1} parent=1 // loop_footer
      %s18 = sadd.s32 1, %s14
    $region7: #{tpu_custom_call.1} parent=1 // loop_footer_branch
      %13 = sbr.rel target = $region3
    $region8: #{tpu_custom_call.1} parent=1 // loop_exit
      _
    %399 = vsyncpa [#allocation3], 1
    %s400 = scalar_lea.sflag [#allocation3], 1
    %401 = vsyncpa %s400, 1
    %402 = vsyncpa [#allocation6], 1
    %403 = vsyncpa [#allocation4], 1
    %s404 = scalar_lea.sflag [#allocation4], 1
    %405 = vsyncpa %s404, 1

</llo_original>
